<compile_context>
chip_gen: v5e
topology: v5e:2x2
jax: 0.10.0
libtpu: 0.0.40
codegen_flags: <defaults>
</compile_context>

<pallas_src>
import jax
import jax.numpy as jnp
from jax.experimental import pallas as pl
from jax.experimental.pallas import tpu as pltpu


def _round_up(v, m):
    return (v + m - 1) // m * m


def _linear_kernel(x_ref, w_ref, b_ref, o_ref, acc_ref):
    # x_ref: [TILE_M, TILE_K]  w_ref: [TILE_K, N_pad]  b_ref: [1, N_pad]
    # o_ref: [TILE_M, N_pad]   acc_ref: [TILE_M, N_pad] f32 scratch
    k = pl.program_id(1)

    @pl.when(k == 0)
    def _():
        # Fold the bias add into the accumulator init.
        acc_ref[...] = jnp.broadcast_to(b_ref[...], acc_ref.shape).astype(jnp.float32)

    acc_ref[...] += jnp.dot(
        x_ref[...], w_ref[...], preferred_element_type=jnp.float32
    )

    @pl.when(k == pl.num_programs(1) - 1)
    def _():
        o_ref[...] = acc_ref[...].astype(o_ref.dtype)


def _pick_tile_m(M, tile_k, n_pad, budget_bytes=14 * 1024 * 1024):
    """Largest TILE_M whose pipelined VMEM footprint fits the budget."""
    if M <= 512:
        return _round_up(max(M, 1), 8)
    for cand in (1024, 512, 256, 128):
        words = (
            2 * cand * tile_k        # x tile, double-buffered
            + 2 * tile_k * n_pad     # weight tile, double-buffered
            + 2 * n_pad              # bias
            + 2 * cand * n_pad       # output tile, double-buffered
            + cand * n_pad           # f32 accumulator scratch
        )
        if words * 4 <= budget_bytes:
            return cand
    return 128


def speaker_classifier_forward(x, weight, bias):
    """Equivalent of `nn.Linear(indims, n_spk)(x)`.

    x:      (..., indims)   float32
    weight: (n_spk, indims) float32  (PyTorch convention)
    bias:   (n_spk,)        float32
    returns (..., n_spk)    float32
    """
    *lead, indims = x.shape
    n_spk = weight.shape[0]

    x2d = x.reshape(-1, indims)  # [M, K]
    M = x2d.shape[0]

    # Lane-dense / MXU-aligned padding of feature and output dims.
    if indims <= 1024:
        K_pad = _round_up(max(indims, 1), 128)
        TILE_K = K_pad                      # single K tile -> weight VMEM-resident
    else:
        TILE_K = 512                        # reduce over K with the accumulator
        K_pad = _round_up(indims, TILE_K)
    N_pad = _round_up(max(n_spk, 1), 128)

    TILE_M = _pick_tile_m(M, TILE_K, N_pad)
    M_pad = _round_up(M, TILE_M)

    # Zero-padded operands (padded regions exactly zero -> sliced output exact).
    x_p = jnp.pad(x2d, ((0, M_pad - M), (0, K_pad - indims)))
    w_p = jnp.pad(weight.T, ((0, K_pad - indims), (0, N_pad - n_spk)))
    b_p = jnp.pad(bias, (0, N_pad - n_spk)).reshape(1, N_pad)

    grid = (M_pad // TILE_M, K_pad // TILE_K)

    out_p = pl.pallas_call(
        _linear_kernel,
        out_shape=jax.ShapeDtypeStruct((M_pad, N_pad), x.dtype),
        grid=grid,
        in_specs=[
            pl.BlockSpec((TILE_M, TILE_K), lambda i, k: (i, k)),  # x tile
            pl.BlockSpec((TILE_K, N_pad), lambda i, k: (k, 0)),   # weight tile
            pl.BlockSpec((1, N_pad), lambda i, k: (0, 0)),        # bias (resident)
        ],
        out_specs=pl.BlockSpec((TILE_M, N_pad), lambda i, k: (i, 0)),
        scratch_shapes=[pltpu.VMEM((TILE_M, N_pad), jnp.float32)],
        compiler_params=pltpu.CompilerParams(
            dimension_semantics=("parallel", "arbitrary"),
        ),
    )(x_p, w_p, b_p)

    out2d = out_p[:M, :n_spk]
    return out2d.reshape(*lead, n_spk)


if __name__ == "__main__":
    # Small shapes implied by the module: x = (batch, seq, indims), Linear(indims, n_spk)
    batch, seq, indims, n_spk = 2, 8, 32, 16

    key = jax.random.PRNGKey(0)
    kx, kw, kb = jax.random.split(key, 3)

    x = jax.random.normal(kx, (batch, seq, indims), dtype=jnp.float32)
    # Deterministic parameter init (PyTorch-style uniform bound 1/sqrt(indims)).
    bound = 1.0 / jnp.sqrt(jnp.float32(indims))
    weight = jax.random.uniform(kw, (n_spk, indims), jnp.float32, -bound, bound)
    bias = jax.random.uniform(kb, (n_spk,), jnp.float32, -bound, bound)

    out = speaker_classifier_forward(x, weight, bias)
    jax.block_until_ready(out)

    ref = x @ weight.T + bias
    assert out.shape == (batch, seq, n_spk)
    assert jnp.allclose(out, ref, atol=1e-5, rtol=1e-5)

    # Larger M: exercises the tiled / pipelined M path and M padding.
    big_M = 3000  # not a multiple of TILE_M
    xb = jax.random.normal(kx, (big_M, indims), dtype=jnp.float32)
    out_b = speaker_classifier_forward(xb, weight, bias)
    jax.block_until_ready(out_b)
    ref_b = xb @ weight.T + bias
    assert out_b.shape == (big_M, n_spk)
    assert jnp.allclose(out_b, ref_b, atol=1e-4, rtol=1e-4)

    # Wide features: exercises the K-reduction grid axis + accumulator path.
    indims2, n_spk2, M2 = 1280, 24, 512
    kx2, kw2, kb2 = jax.random.split(jax.random.PRNGKey(1), 3)
    x2 = jax.random.normal(kx2, (M2, indims2), dtype=jnp.float32)
    bound2 = 1.0 / jnp.sqrt(jnp.float32(indims2))
    w2 = jax.random.uniform(kw2, (n_spk2, indims2), jnp.float32, -bound2, bound2)
    b2 = jax.random.uniform(kb2, (n_spk2,), jnp.float32, -bound2, bound2)
    out_c = speaker_classifier_forward(x2, w2, b2)
    jax.block_until_ready(out_c)
    ref_c = x2 @ w2.T + b2
    assert out_c.shape == (M2, n_spk2)
    assert jnp.allclose(out_c, ref_c, atol=1e-4, rtol=1e-4)

    print("KERNEL_OK")
</pallas_src>

<mosaic_0001>
module attributes {stable_mosaic.version = 11 : i64} {
  func.func @_linear_kernel(%arg0: i32, %arg1: i32, %arg2: memref<16x128xf32, #tpu.memory_space<vmem>>, %arg3: memref<128x128xf32, #tpu.memory_space<vmem>>, %arg4: memref<1x128xf32, #tpu.memory_space<vmem>>, %arg5: memref<16x128xf32, #tpu.memory_space<vmem>>, %arg6: memref<16x128xf32, #tpu.memory_space<vmem>>) attributes {dimension_semantics = [#tpu.dimension_semantics<parallel>, #tpu.dimension_semantics<arbitrary>], iteration_bounds = array<i64: 1, 1>, scalar_prefetch = 0 : i64, scratch_operands = 1 : i64, tpu.core_type = #tpu.core_type<tc>, window_params = [{transform_indices = @transform_0, window_bounds = array<i64: 16, 128>}, {transform_indices = @transform_1, window_bounds = array<i64: 128, 128>}, {pipeline_mode = #tpu.pipeline_mode<synchronous>, transform_indices = @transform_2, window_bounds = array<i64: 1, 128>}, {transform_indices = @transform_3, window_bounds = array<i64: 16, 128>}]} {
    %c0_i32 = arith.constant 0 : i32
    %0 = arith.cmpi eq, %arg1, %c0_i32 : i32
    %1 = arith.extui %0 : i1 to i32
    %c0_i32_0 = arith.constant 0 : i32
    %2 = arith.cmpi ne, %1, %c0_i32_0 : i32
    scf.if %2 {
      %c0_10 = arith.constant 0 : index
      %c0_11 = arith.constant 0 : index
      %12 = vector.load %arg4[%c0_10, %c0_11] : memref<1x128xf32, #tpu.memory_space<vmem>>, vector<1x128xf32>
      %13 = vector.shape_cast %12 : vector<1x128xf32> to vector<1x128xf32>
      %14 = vector.broadcast %13 : vector<1x128xf32> to vector<16x128xf32>
      %c0_12 = arith.constant 0 : index
      %c0_13 = arith.constant 0 : index
      %15 = vector.load %arg6[%c0_12, %c0_13] : memref<16x128xf32, #tpu.memory_space<vmem>>, vector<16x128xf32>
      tpu.vector_store %arg6[%c0_12, %c0_13], %14 {strides = array<i32>} : memref<16x128xf32, #tpu.memory_space<vmem>>, vector<16x128xf32>,
    } else {
    }
    %c0 = arith.constant 0 : index
    %c0_1 = arith.constant 0 : index
    %3 = vector.load %arg6[%c0, %c0_1] : memref<16x128xf32, #tpu.memory_space<vmem>>, vector<16x128xf32>
    %c0_2 = arith.constant 0 : index
    %c0_3 = arith.constant 0 : index
    %4 = vector.load %arg2[%c0_2, %c0_3] : memref<16x128xf32, #tpu.memory_space<vmem>>, vector<16x128xf32>
    %c0_4 = arith.constant 0 : index
    %c0_5 = arith.constant 0 : index
    %5 = vector.load %arg3[%c0_4, %c0_5] : memref<128x128xf32, #tpu.memory_space<vmem>>, vector<128x128xf32>
    %cst = arith.constant dense<0.000000e+00> : vector<16x128xf32>
    %6 = tpu.matmul %4, %5, %cst {dimension_numbers = #tpu.dot_dimension_numbers<[1], [0], [0], [1], [0, 0, 1, 1], [], []>} : vector<16x128xf32>, vector<128x128xf32>, vector<16x128xf32> -> vector<16x128xf32>
    %7 = arith.addf %3, %6 : vector<16x128xf32>
    %c0_6 = arith.constant 0 : index
    %c0_7 = arith.constant 0 : index
    %8 = vector.load %arg6[%c0_6, %c0_7] : memref<16x128xf32, #tpu.memory_space<vmem>>, vector<16x128xf32>
    tpu.vector_store %arg6[%c0_6, %c0_7], %7 {strides = array<i32>} : memref<16x128xf32, #tpu.memory_space<vmem>>, vector<16x128xf32>,
    %c0_i32_8 = arith.constant 0 : i32
    %9 = arith.cmpi eq, %arg1, %c0_i32_8 : i32
    %10 = arith.extui %9 : i1 to i32
    %c0_i32_9 = arith.constant 0 : i32
    %11 = arith.cmpi ne, %10, %c0_i32_9 : i32
    scf.if %11 {
      %c0_10 = arith.constant 0 : index
      %c0_11 = arith.constant 0 : index
      %12 = vector.load %arg6[%c0_10, %c0_11] : memref<16x128xf32, #tpu.memory_space<vmem>>, vector<16x128xf32>
      %c0_12 = arith.constant 0 : index
      %c0_13 = arith.constant 0 : index
      %13 = vector.load %arg5[%c0_12, %c0_13] : memref<16x128xf32, #tpu.memory_space<vmem>>, vector<16x128xf32>
      tpu.vector_store %arg5[%c0_12, %c0_13], %12 {strides = array<i32>} : memref<16x128xf32, #tpu.memory_space<vmem>>, vector<16x128xf32>,
    } else {
    }
    return
  }
  func.func @transform_0(%arg0: i32, %arg1: i32) -> (i32, i32) {
    %c0_i32 = arith.constant 0 : i32
    return %arg0, %arg1 : i32, i32
  }
  func.func @transform_1(%arg0: i32, %arg1: i32) -> (i32, i32) {
    %c0_i32 = arith.constant 0 : i32
    %c0_i32_0 = arith.constant 0 : i32
    return %arg1, %c0_i32 : i32, i32
  }
  func.func @transform_2(%arg0: i32, %arg1: i32) -> (i32, i32) {
    %c0_i32 = arith.constant 0 : i32
    %c0_i32_0 = arith.constant 0 : i32
    %c0_i32_1 = arith.constant 0 : i32
    return %c0_i32, %c0_i32_0 : i32, i32
  }
  func.func @transform_3(%arg0: i32, %arg1: i32) -> (i32, i32) {
    %c0_i32 = arith.constant 0 : i32
    %c0_i32_0 = arith.constant 0 : i32
    return %arg0, %c0_i32 : i32, i32
  }
}

</mosaic_0001>

<llo_original>
// kernel: tpu_custom_call.1
$region0: #{tpu_custom_call.1}
  #allocation0 [shape = 'u32[]', space=smem, size = 0x4, offset = 0x4, fixed_abs, tag = 'smem constant byte address 0x4 - core index']
  #allocation1 [shape = 'u32[72,128]{1,0:T(1,128)}', space=vmem, size = 0x9000, scoped, tag = 'internal scratch']
  #allocation2 [shape = 'f32[16,128]{1,0:T(8,128)}', space=vmem, size = 0x2000, scoped, tag = 'scratch operand']
  %s0 = inlined_call_operand.hbm [shape: f32[16,128], index: 0, kind: input, shape index: {}]
  %s1 = inlined_call_operand.hbm [shape: f32[128,128], index: 1, kind: input, shape index: {}]
  %s2 = inlined_call_operand.vmem [shape: f32[1,128], index: 2, kind: input, shape index: {}]
  %s3 = inlined_call_operand.hbm [shape: f32[16,128], index: 3, kind: output, shape index: {}]
  %s4 = sld [smem:[#allocation0]]
  $region38: #{tpu_custom_call.1} parent=0
    _
  %s6 = ssub.s32 1, %s4
  %s7 = scalar_select 0, %s6, %s4
  $region1: #{tpu_custom_call.1} parent=0
    #allocation3 [shape = 'u8[8192]{0}', space=vmem, size = 0x2000, scoped, tag = 'input window, operand 0, single buffered']
    #allocation4 [shape = 's32[1]{0}', space=sflag, size = 0x4, scoped, tag = 'scoped memory for tpu_custom_call.1']
    #allocation5 [shape = 's32[1]{0}', space=sflag, size = 0x4, scoped, tag = 'scoped memory for tpu_custom_call.1']
    #allocation6 [shape = 'u8[65536]{0}', space=vmem, size = 0x10000, scoped, tag = 'input window, operand 1, single buffered']
    #allocation7 [shape = 's32[1]{0}', space=sflag, size = 0x4, scoped, tag = 'scoped memory for tpu_custom_call.1']
    #allocation8 [shape = 'u8[8192]{0}', space=vmem, size = 0x2000, scoped, tag = 'output window, operand 0, single buffered']
    %8 = vsyncpa [#allocation4], 0
    %9 = vsyncpa [#allocation7], 0
    %10 = vsyncpa [#allocation5], 0
    // Predicated region
    $region2: #{tpu_custom_call.1} parent=1 // pred_check
      _
    $region3: #{tpu_custom_call.1} parent=1 // pred_check_branch
      %12 = sbr.rel (0) target = $region5
    $region4: #{tpu_custom_call.1} parent=1 // pred_region
      %14 = vsyncadd [#allocation4], 0
      %s15 = sshll.u32 %s0, 4
      %s16 = int_to_ptr.hbm [resolvable:$true] %s15
      %s17 = sshll.u32 [#allocation3], 4
      %s18 = int_to_ptr.vmem [resolvable:$true] %s17
      %23 = dma.hbm_to_vmem [thread:$0]  %s16, 256, %s18, [#allocation4], 128, 128, 8
    $region5: #{tpu_custom_call.1} parent=1 // pred_fallthru
      _
    // Predicated region
    $region6: #{tpu_custom_call.1} parent=1 // pred_check
      _
    $region7: #{tpu_custom_call.1} parent=1 // pred_check_branch
      %25 = sbr.rel (0) target = $region9
    $region8: #{tpu_custom_call.1} parent=1 // pred_region
      %27 = vsyncadd [#allocation7], 0
      %s28 = sshll.u32 %s1, 4
      %s29 = int_to_ptr.hbm [resolvable:$true] %s28
      %s30 = sshll.u32 [#allocation6], 4
      %s31 = int_to_ptr.vmem [resolvable:$true] %s30
      %36 = dma.hbm_to_vmem [thread:$0]  %s29, 2048, %s31, [#allocation7], 128, 128, 8
    $region9: #{tpu_custom_call.1} parent=1 // pred_fallthru
      _
    // Predicated region
    $region10: #{tpu_custom_call.1} parent=1 // pred_check
      _
    $region11: #{tpu_custom_call.1} parent=1 // pred_check_branch
      %38 = sbr.rel (0) target = $region13
    $region12: #{tpu_custom_call.1} parent=1 // pred_region
      _
    $region13: #{tpu_custom_call.1} parent=1 // pred_fallthru
      _
    // Predicated region
    $region14: #{tpu_custom_call.1} parent=1 // pred_check
      _
    $region15: #{tpu_custom_call.1} parent=1 // pred_check_branch
      %40 = sbr.rel (0) target = $region17
    $region16: #{tpu_custom_call.1} parent=1 // pred_region
      %42 = dma.done [#allocation4], 256
    $region17: #{tpu_custom_call.1} parent=1 // pred_fallthru
      _
    // Predicated region
    $region18: #{tpu_custom_call.1} parent=1 // pred_check
      _
    $region19: #{tpu_custom_call.1} parent=1 // pred_check_branch
      %44 = sbr.rel (0) target = $region21
    $region20: #{tpu_custom_call.1} parent=1 // pred_region
      %46 = dma.done [#allocation7], 2048
    $region21: #{tpu_custom_call.1} parent=1 // pred_fallthru
      _
    %p47 = scmp.eq.s32.totalorder 0, 0
    // Predicated region
    $region22: #{tpu_custom_call.1} parent=1 // pred_check
      %p48 = pneg %p47
    $region23: #{tpu_custom_call.1} parent=1 // pred_check_branch
      %50 = sbr.rel (%p48) target = $region25
    $region24: #{tpu_custom_call.1} parent=1 // pred_region
      %v51 = vld [vmem:[%s2] sm:$0x1]
      %v53 = vperm.slane %v51, 0
      %55 = vst [vmem:[#allocation2] sm:$0xff] %v53
      %56 = vst [vmem:[#allocation2 + $0x8] sm:$0xff] %v53
    $region25: #{tpu_custom_call.1} parent=1 // pred_fallthru
      _
    %v57 = vld [vmem:[#allocation2] sm:$0xff]
    %v58 = vld [vmem:[#allocation2 + $0x8] sm:$0xff]
    %v59 = vld [vmem:[#allocation3] sm:$0xff]
    %v60 = vld [vmem:[#allocation3 + $0x8] sm:$0xff]
    %v61 = vld [vmem:[#allocation6] sm:$0xff]
    %v62 = vld [vmem:[#allocation6 + $0x8] sm:$0xff]
    %v63 = vld [vmem:[#allocation6 + $0x10] sm:$0xff]
    %v64 = vld [vmem:[#allocation6 + $0x18] sm:$0xff]
    %v65 = vld [vmem:[#allocation6 + $0x20] sm:$0xff]
    %v66 = vld [vmem:[#allocation6 + $0x28] sm:$0xff]
    %v67 = vld [vmem:[#allocation6 + $0x30] sm:$0xff]
    %v68 = vld [vmem:[#allocation6 + $0x38] sm:$0xff]
    %v69 = vld [vmem:[#allocation6 + $0x40] sm:$0xff]
    %v70 = vld [vmem:[#allocation6 + $0x48] sm:$0xff]
    %v71 = vld [vmem:[#allocation6 + $0x50] sm:$0xff]
    %v72 = vld [vmem:[#allocation6 + $0x58] sm:$0xff]
    %v73 = vld [vmem:[#allocation6 + $0x60] sm:$0xff]
    %v74 = vld [vmem:[#allocation6 + $0x68] sm:$0xff]
    %v75 = vld [vmem:[#allocation6 + $0x70] sm:$0xff]
    %v76 = vld [vmem:[#allocation6 + $0x78] sm:$0xff]
    %77 = vmatpush.msra.mxu0 %v76
    %78 = vmatpush.msra.mxu0 %v75
    %79 = vmatpush.msra.mxu0 %v74
    %80 = vmatpush.msra.mxu0 %v73
    %81 = vmatpush.msra.mxu0 %v72
    %82 = vmatpush.msra.mxu0 %v71
    %83 = vmatpush.msra.mxu0 %v70
    %84 = vmatpush.msra.mxu0 %v69
    %85 = vmatpush.msra.mxu0 %v68
    %86 = vmatpush.msra.mxu0 %v67
    %87 = vmatpush.msra.mxu0 %v66
    %88 = vmatpush.msra.mxu0 %v65
    %89 = vmatpush.msra.mxu0 %v64
    %90 = vmatpush.msra.mxu0 %v63
    %91 = vmatpush.msra.mxu0 %v62
    %92 = vmatpush.msra.mxu0 %v61
    %93 = vmatmul.f32.gmra.mxu0 %v59
    %v94 = vpop.f32.mrf.mxu0
    %v95 = vadd.f32 0.0, %v94
    %96 = vmatmul.f32.gmra.mxu0 %v60
    %v97 = vpop.f32.mrf.mxu0
    %v98 = vadd.f32 0.0, %v97
    %99 = vdwg.mxu0
    %v100 = vadd.f32 %v57, %v95
    %v101 = vadd.f32 %v58, %v98
    %102 = vst [vmem:[#allocation2] sm:$0xff] %v100
    %103 = vst [vmem:[#allocation2 + $0x8] sm:$0xff] %v101
    // Predicated region
    $region26: #{tpu_custom_call.1} parent=1 // pred_check
      %p104 = pneg %p47
    $region27: #{tpu_custom_call.1} parent=1 // pred_check_branch
      %106 = sbr.rel (%p104) target = $region29
    $region28: #{tpu_custom_call.1} parent=1 // pred_region
      %v107 = vld [vmem:[#allocation2] sm:$0xff]
      %v108 = vld [vmem:[#allocation2 + $0x8] sm:$0xff]
      %109 = vst [vmem:[#allocation8] sm:$0xff] %v107
      %110 = vst [vmem:[#allocation8 + $0x8] sm:$0xff] %v108
    $region29: #{tpu_custom_call.1} parent=1 // pred_fallthru
      _
    // Predicated region
    $region30: #{tpu_custom_call.1} parent=1 // pred_check
      _
    $region31: #{tpu_custom_call.1} parent=1 // pred_check_branch
      %112 = sbr.rel (0) target = $region33
    $region32: #{tpu_custom_call.1} parent=1 // pred_region
      %114 = vsyncadd [#allocation5], 0
      %s115 = sshll.u32 [#allocation8], 4
      %s116 = int_to_ptr.vmem [resolvable:$true] %s115
      %s117 = sshll.u32 %s3, 4
      %s118 = int_to_ptr.hbm [resolvable:$true] %s117
      %123 = dma.vmem_to_hbm [thread:$0]  %s116, 256, %s118, [#allocation5], 128, 128, 8
    $region33: #{tpu_custom_call.1} parent=1 // pred_fallthru
      _
    // Predicated region
    $region34: #{tpu_custom_call.1} parent=1 // pred_check
      _
    $region35: #{tpu_custom_call.1} parent=1 // pred_check_branch
      %125 = sbr.rel (0) target = $region37
    $region36: #{tpu_custom_call.1} parent=1 // pred_region
      %127 = dma.done [#allocation5], 256
    $region37: #{tpu_custom_call.1} parent=1 // pred_fallthru
      _
    %128 = vsyncpa [#allocation4], 1
    %129 = vsyncpa [#allocation7], 1
    %130 = vsyncpa [#allocation5], 1

</llo_original>
